<compile_context>
chip_gen: v6e
topology: v6e:2x2x1
jax: 0.10.0
libtpu: 0.0.40
codegen_flags: <defaults>
</compile_context>

<pallas_src>
import numpy as np
import jax
import jax.numpy as jnp
from jax import lax
from jax.experimental import pallas as pl
from jax.experimental.pallas import tpu as pltpu

POOL_SIZES = (1, 2, 3, 6)
NUM_BRANCHES = len(POOL_SIZES)
TOTAL_COLS = sum(s * s for s in POOL_SIZES)                                   # 50
_BOUNDS = tuple(int(v) for v in np.cumsum([s * s for s in POOL_SIZES]))       # (1, 5, 14, 50)
_STARTS = (0,) + _BOUNDS[:-1]                                                 # (0, 1, 5, 14)


# --------------------------------------------------------------------------
# Host-side helpers (pooling-matrix construction, BN/conv folding)
# --------------------------------------------------------------------------
def _adaptive_pool_1d(in_size, out_size):
    """1-D adaptive-average-pool weights, same bins as PyTorch."""
    P = np.zeros((out_size, in_size), dtype=np.float32)
    for i in range(out_size):
        start = (i * in_size) // out_size
        end = -(((-(i + 1)) * in_size) // out_size)   # ceil((i+1)*in/out)
        P[i, start:end] = 1.0 / float(end - start)
    return P


def build_pool_matrix(h, w):
    """(H*W, 50): pooled[c, p] = x_row_c @ M[:, p] for all 4 adaptive-avg-pool branches."""
    mats = [np.kron(_adaptive_pool_1d(h, s), _adaptive_pool_1d(w, s)) for s in POOL_SIZES]
    return np.ascontiguousarray(np.concatenate(mats, axis=0).T)              # (HW, 50)


def fold_params(conv_w, bn_gamma, bn_beta, bn_mean, bn_var, eps):
    """Fold BN (eval mode) into the 1x1 convs.

    Returns:
      w_stacked : (C, 4C)  w_stacked[o, k*C + c] = conv_w[k, o, c] * scale[k, o]
      shift_cp  : (C, 50)  shift_cp[o, p]        = shift[branch(p), o]
      scale, shift : (4, C) for the pure-f32 reference.
    """
    scale = bn_gamma / jnp.sqrt(bn_var + eps)            # (4, C)
    shift = bn_beta - bn_mean * scale                    # (4, C)
    C = conv_w.shape[-1]
    w_stacked = jnp.concatenate(
        [conv_w[k] * scale[k][:, None] for k in range(NUM_BRANCHES)], axis=1)        # (C, 4C)
    shift_cp = jnp.concatenate(
        [jnp.broadcast_to(shift[k][:, None], (C, s * s)) for k, s in enumerate(POOL_SIZES)],
        axis=1)                                                                       # (C, 50)
    return w_stacked, shift_cp, scale, shift


# --------------------------------------------------------------------------
# Pallas kernel
# --------------------------------------------------------------------------
def cpam_enc_kernel(x_ref, m_ref, w_ref, shift_ref, o_ref):
    # x_ref     : (bb, C, HW) f32   native layout; cast to compute dtype in-kernel
    # m_ref     : (HW, P)     bf16  pooling matrix, all 4 branches (P = 50)
    # w_ref     : (C, 4C)     bf16  folded conv*BN-scale weights, branches stacked on K
    # shift_ref : (C, P)      f32   per-(channel, pooled-position) folded BN shift
    # o_ref     : (bb, C, P)        output (f32 by default)
    bb = x_ref.shape[0]
    P = m_ref.shape[1]

    m = m_ref[...]
    w = w_ref[...]
    shift = shift_ref[...]

    # Branch-selection masks on the pooled-position (lane) axis — hoisted out of
    # the per-batch loop (JAX does not CSE broadcast_in_dim).
    col = lax.broadcasted_iota(jnp.int32, (1, P), 1)
    masks = [((col >= lo) & (col < hi)).astype(jnp.float32)
             for lo, hi in zip(_STARTS, _BOUNDS)]

    def body(b, carry):
        xb = x_ref[b].astype(m.dtype)                                        # (C, HW)
        # All 4 adaptive average pools in one MXU matmul, f32 accumulation.
        pooled = jnp.dot(xb, m, preferred_element_type=jnp.float32)          # (C, P)
        # Fold the per-column branch selection into the contraction: stack
        # masked copies of pooled on K, one matmul against the (C, 4C) weight.
        stacked = jnp.concatenate([pooled * mk for mk in masks],
                                  axis=0).astype(w.dtype)                    # (4C, P)
        y = jnp.dot(w, stacked, preferred_element_type=jnp.float32)          # (C, P)
        o_ref[b] = jnp.maximum(y + shift, 0.0).astype(o_ref.dtype)
        return carry

    lax.fori_loop(0, bb, body, 0)


# --------------------------------------------------------------------------
# Wrapper
# --------------------------------------------------------------------------
def _vmem_capacity_bytes():
    try:
        return int(pltpu.get_tpu_info().vmem_capacity_bytes)
    except Exception:
        return 64 * 1024 * 1024          # conservative (v7x physical VMEM)


def cpam_enc(x_bchw, conv_w, bn_gamma, bn_beta, bn_mean, bn_var, eps=1e-5,
             compute_dtype=jnp.bfloat16, out_dtype=jnp.float32, block_b=None):
    """x: (B, C, H, W) f32 -> (B, C, 50)  (== torch.cat of the 4 branch features)."""
    B, C, H, W = x_bchw.shape
    HW = H * W
    P = TOTAL_COLS

    w_stacked, shift_cp, _, _ = fold_params(conv_w, bn_gamma, bn_beta, bn_mean, bn_var, eps)
    M = jnp.asarray(build_pool_matrix(H, W)).astype(compute_dtype)           # (HW, P)
    w_c = w_stacked.astype(compute_dtype)                                    # (C, 4C)
    s_c = shift_cp.astype(jnp.float32)                                       # (C, P)
    x3 = x_bchw.reshape(B, C, HW)      # metadata-only reshape; no transpose / cast pass over HBM

    cd = jnp.dtype(compute_dtype).itemsize
    x_size = jnp.dtype(x3.dtype).itemsize
    o_size = jnp.dtype(out_dtype).itemsize

    # ---- VMEM-aware, generation-aware block_b selection -------------------
    vmem_cap = _vmem_capacity_bytes()
    vmem_target = int(0.8 * vmem_cap)
    # constants (budgeted as double-buffered worst case, single-buffered when Buffered(1) applies)
    const_bytes = 2 * (HW * P * cd + NUM_BRANCHES * C * C * cd + C * P * 4)
    # per-batch in-kernel temporaries (live one batch at a time thanks to fori_loop)
    temp_bytes = C * HW * cd + C * P * 4 + NUM_BRANCHES * C * P * (4 + cd) + C * P * 4
    per_b = 2 * (C * HW * x_size + C * P * o_size)     # double-buffered x / out blocks
    margin = 2 << 20

    if block_b is None:
        avail = vmem_target - const_bytes - temp_bytes - margin
        bb_cap = max(1, avail // per_b) if avail > 0 else 1
        core_cap = max(1, B // 2)       # >= 2 grid steps so both v7x TensorCores get work
        bb = 1
        for cand in range(1, B + 1):
            if B % cand == 0 and cand <= bb_cap and cand <= core_cap:
                bb = cand
    else:
        bb = block_b
    assert B % bb == 0, "block_b must divide B"

    needed = bb * per_b + const_bytes + temp_bytes + margin
    vmem_limit = int(min(0.9 * vmem_cap, max(needed + (4 << 20), 32 * 1024 * 1024)))

    flops = 2 * B * C * HW * P + 2 * B * C * (NUM_BRANCHES * C) * P
    bytes_accessed = (B * C * HW * x_size + HW * P * cd
                      + NUM_BRANCHES * C * C * cd + C * P * 4 + B * C * P * o_size)

    def build_call(single_buffer_consts):
        def const_spec(shape):
            if single_buffer_consts:
                return pl.BlockSpec(shape, lambda i: (0, 0), pipeline_mode=pl.Buffered(1))
            return pl.BlockSpec(shape, lambda i: (0, 0))
        return pl.pallas_call(
            cpam_enc_kernel,
            out_shape=jax.ShapeDtypeStruct((B, C, P), out_dtype),
            grid=(B // bb,),
            in_specs=[
                pl.BlockSpec((bb, C, HW), lambda i: (i, 0, 0)),
                const_spec((HW, P)),
                const_spec((C, NUM_BRANCHES * C)),
                const_spec((C, P)),
            ],
            out_specs=pl.BlockSpec((bb, C, P), lambda i: (i, 0, 0)),
            compiler_params=pltpu.CompilerParams(
                dimension_semantics=("parallel",),
                vmem_limit_bytes=vmem_limit),
            cost_estimate=pl.CostEstimate(flops=int(flops), transcendentals=0,
                                          bytes_accessed=int(bytes_accessed)),
        )

    try:
        return build_call(hasattr(pl, "Buffered"))(x3, M, w_c, s_c)
    except Exception:
        # Fall back to default double-buffering if Buffered(1) is unsupported.
        return build_call(False)(x3, M, w_c, s_c)


# --------------------------------------------------------------------------
# References
# --------------------------------------------------------------------------
def reference_f32(x_bchw, conv_w, scale, shift):
    """Pure-f32 NumPy mirror of the PyTorch forward (BN in eval mode)."""
    B, C, H, Wd = x_bchw.shape
    feats = []
    for k, s in enumerate(POOL_SIZES):
        Ph = _adaptive_pool_1d(H, s)
        Pw = _adaptive_pool_1d(Wd, s)
        pooled = np.einsum('ih,jw,bchw->bcij', Ph, Pw, x_bchw)               # (B,C,s,s)
        conv = np.einsum('oc,bcij->boij', conv_w[k], pooled)                 # (B,C,s,s)
        y = conv * scale[k].reshape(1, C, 1, 1) + shift[k].reshape(1, C, 1, 1)
        feats.append(np.maximum(y, 0.0).reshape(B, C, s * s))
    return np.concatenate(feats, axis=2)                                     # (B,C,50)


def _bf16_round(a):
    return np.asarray(jnp.asarray(np.asarray(a, np.float32))
                      .astype(jnp.bfloat16).astype(jnp.float32))


def reference_bf16_emulated(x_bchw, m_np, w_stacked, shift_cp):
    """NumPy mirror of the kernel pipeline with its bf16 roundings applied."""
    B, C, H, Wd = x_bchw.shape
    HW = H * Wd
    P = m_np.shape[1]
    xq = _bf16_round(x_bchw).reshape(B, C, HW)
    mq = _bf16_round(m_np)
    wq = _bf16_round(w_stacked)
    sh = np.asarray(shift_cp, np.float32)
    cols = np.arange(P)
    masks = [((cols >= lo) & (cols < hi)).astype(np.float32)
             for lo, hi in zip(_STARTS, _BOUNDS)]
    out = np.zeros((B, C, P), np.float32)
    for b in range(B):
        pooled = _bf16_round(xq[b] @ mq)                                     # (C, P)
        stacked = np.concatenate([pooled * mk for mk in masks], axis=0)      # (4C, P)
        y = wq @ stacked                                                     # (C, P)
        out[b] = np.maximum(y + sh, 0.0)
    return out                                                               # (B, C, 50)


# --------------------------------------------------------------------------
if __name__ == "__main__":
    B, C, H, W_SP = 2, 4, 16, 16

    key = jax.random.PRNGKey(0)
    k_x, k_w, k_g, k_b, k_m, k_v = jax.random.split(key, 6)

    # bf16-representable input so the kernel's in-kernel bf16 cast is lossless.
    x_bchw = jax.random.normal(k_x, (B, C, H, W_SP), dtype=jnp.float32)
    x_bchw = x_bchw.astype(jnp.bfloat16).astype(jnp.float32)

    conv_w = jax.random.normal(k_w, (NUM_BRANCHES, C, C), dtype=jnp.float32) * 0.3
    bn_gamma = 1.0 + 0.1 * jax.random.normal(k_g, (NUM_BRANCHES, C), dtype=jnp.float32)
    bn_beta = 0.1 * jax.random.normal(k_b, (NUM_BRANCHES, C), dtype=jnp.float32)
    bn_mean = 0.1 * jax.random.normal(k_m, (NUM_BRANCHES, C), dtype=jnp.float32)
    bn_var = jnp.abs(jax.random.normal(k_v, (NUM_BRANCHES, C), dtype=jnp.float32)) + 0.5
    eps = 1e-5

    out = cpam_enc(x_bchw, conv_w, bn_gamma, bn_beta, bn_mean, bn_var, eps=eps)
    out = np.asarray(jax.block_until_ready(out))                             # (B, C, 50)

    # Check 1 (tight): kernel pipeline with the bf16 quantization emulated in NumPy.
    w_stacked, shift_cp, scale, shift = fold_params(conv_w, bn_gamma, bn_beta,
                                                    bn_mean, bn_var, eps)
    m_np = build_pool_matrix(H, W_SP)
    emu = reference_bf16_emulated(np.asarray(x_bchw), m_np,
                                  np.asarray(w_stacked), np.asarray(shift_cp))
    np.testing.assert_allclose(out, emu, rtol=1e-2, atol=1e-2)

    # Check 2 (semantics): pure-f32 mirror of the PyTorch module forward.
    ref = reference_f32(np.asarray(x_bchw), np.asarray(conv_w),
                        np.asarray(scale), np.asarray(shift))
    np.testing.assert_allclose(out, ref, rtol=5e-2, atol=5e-2)

    print("KERNEL_OK")
</pallas_src>

<mosaic_0001>
module attributes {stable_mosaic.version = 11 : i64} {
  func.func @cpam_enc_kernel(%arg0: i32, %arg1: memref<1x4x256xf32, #tpu.memory_space<vmem>>, %arg2: memref<256x50xbf16, #tpu.memory_space<vmem>>, %arg3: memref<4x16xbf16, #tpu.memory_space<vmem>>, %arg4: memref<4x50xf32, #tpu.memory_space<vmem>>, %arg5: memref<1x4x50xf32, #tpu.memory_space<vmem>>) attributes {dimension_semantics = [#tpu.dimension_semantics<parallel>], iteration_bounds = array<i64: 2>, scalar_prefetch = 0 : i64, scratch_operands = 0 : i64, tpu.core_type = #tpu.core_type<tc>, window_params = [{transform_indices = @transform_0, window_bounds = array<i64: 1, 4, 256>}, {pipeline_mode = #tpu.pipeline_mode<synchronous>, transform_indices = @transform_1, window_bounds = array<i64: 256, 50>}, {pipeline_mode = #tpu.pipeline_mode<synchronous>, transform_indices = @transform_2, window_bounds = array<i64: 4, 16>}, {pipeline_mode = #tpu.pipeline_mode<synchronous>, transform_indices = @transform_3, window_bounds = array<i64: 4, 50>}, {transform_indices = @transform_4, window_bounds = array<i64: 1, 4, 50>}]} {
    %c0 = arith.constant 0 : index
    %c0_0 = arith.constant 0 : index
    %0 = vector.load %arg2[%c0, %c0_0] : memref<256x50xbf16, #tpu.memory_space<vmem>>, vector<256x50xbf16>
    %c0_1 = arith.constant 0 : index
    %c0_2 = arith.constant 0 : index
    %1 = vector.load %arg3[%c0_1, %c0_2] : memref<4x16xbf16, #tpu.memory_space<vmem>>, vector<4x16xbf16>
    %c0_3 = arith.constant 0 : index
    %c0_4 = arith.constant 0 : index
    %2 = vector.load %arg4[%c0_3, %c0_4] : memref<4x50xf32, #tpu.memory_space<vmem>>, vector<4x50xf32>
    %3 = tpu.iota {dimensions = array<i32: 1>} : vector<1x50xi32>
    %c0_i32 = arith.constant 0 : i32
    %4 = vector.broadcast %c0_i32 : i32 to vector<1x50xi32>
    %5 = arith.cmpi sge, %3, %4 : vector<1x50xi32>
    %c1_i32 = arith.constant 1 : i32
    %6 = vector.broadcast %c1_i32 : i32 to vector<1x50xi32>
    %7 = arith.cmpi slt, %3, %6 : vector<1x50xi32>
    %8 = arith.andi %5, %7 : vector<1x50xi1>
    %9 = arith.extui %8 : vector<1x50xi1> to vector<1x50xi32>
    %10 = arith.sitofp %9 : vector<1x50xi32> to vector<1x50xf32>
    %c1_i32_5 = arith.constant 1 : i32
    %11 = vector.broadcast %c1_i32_5 : i32 to vector<1x50xi32>
    %12 = arith.cmpi sge, %3, %11 : vector<1x50xi32>
    %c5_i32 = arith.constant 5 : i32
    %13 = vector.broadcast %c5_i32 : i32 to vector<1x50xi32>
    %14 = arith.cmpi slt, %3, %13 : vector<1x50xi32>
    %15 = arith.andi %12, %14 : vector<1x50xi1>
    %16 = arith.extui %15 : vector<1x50xi1> to vector<1x50xi32>
    %17 = arith.sitofp %16 : vector<1x50xi32> to vector<1x50xf32>
    %c5_i32_6 = arith.constant 5 : i32
    %18 = vector.broadcast %c5_i32_6 : i32 to vector<1x50xi32>
    %19 = arith.cmpi sge, %3, %18 : vector<1x50xi32>
    %c14_i32 = arith.constant 14 : i32
    %20 = vector.broadcast %c14_i32 : i32 to vector<1x50xi32>
    %21 = arith.cmpi slt, %3, %20 : vector<1x50xi32>
    %22 = arith.andi %19, %21 : vector<1x50xi1>
    %23 = arith.extui %22 : vector<1x50xi1> to vector<1x50xi32>
    %24 = arith.sitofp %23 : vector<1x50xi32> to vector<1x50xf32>
    %c14_i32_7 = arith.constant 14 : i32
    %25 = vector.broadcast %c14_i32_7 : i32 to vector<1x50xi32>
    %26 = arith.cmpi sge, %3, %25 : vector<1x50xi32>
    %c50_i32 = arith.constant 50 : i32
    %27 = vector.broadcast %c50_i32 : i32 to vector<1x50xi32>
    %28 = arith.cmpi slt, %3, %27 : vector<1x50xi32>
    %29 = arith.andi %26, %28 : vector<1x50xi1>
    %30 = arith.extui %29 : vector<1x50xi1> to vector<1x50xi32>
    %31 = arith.sitofp %30 : vector<1x50xi32> to vector<1x50xf32>
    %c0_i32_8 = arith.constant 0 : i32
    %32 = arith.index_cast %c0_i32_8 : i32 to index
    %c0_9 = arith.constant 0 : index
    %c0_10 = arith.constant 0 : index
    %33 = vector.load %arg1[%32, %c0_9, %c0_10] : memref<1x4x256xf32, #tpu.memory_space<vmem>>, vector<1x4x256xf32>
    %34 = vector.shape_cast %33 : vector<1x4x256xf32> to vector<4x256xf32>
    %35 = arith.truncf %34 : vector<4x256xf32> to vector<4x256xbf16>
    %cst = arith.constant dense<0.000000e+00> : vector<4x50xf32>
    %36 = tpu.matmul %35, %0, %cst {dimension_numbers = #tpu.dot_dimension_numbers<[1], [0], [0], [1], [0, 0, 1, 1], [], []>} : vector<4x256xbf16>, vector<256x50xbf16>, vector<4x50xf32> -> vector<4x50xf32>
    %37 = vector.broadcast %10 : vector<1x50xf32> to vector<4x50xf32>
    %38 = arith.mulf %36, %37 : vector<4x50xf32>
    %39 = vector.broadcast %17 : vector<1x50xf32> to vector<4x50xf32>
    %40 = arith.mulf %36, %39 : vector<4x50xf32>
    %41 = vector.broadcast %24 : vector<1x50xf32> to vector<4x50xf32>
    %42 = arith.mulf %36, %41 : vector<4x50xf32>
    %43 = vector.broadcast %31 : vector<1x50xf32> to vector<4x50xf32>
    %44 = arith.mulf %36, %43 : vector<4x50xf32>
    %45 = tpu.concatenate %38, %40, %42, %44 in 0 : vector<4x50xf32>, vector<4x50xf32>, vector<4x50xf32>, vector<4x50xf32> -> vector<16x50xf32>
    %46 = arith.truncf %45 : vector<16x50xf32> to vector<16x50xbf16>
    %cst_11 = arith.constant dense<0.000000e+00> : vector<4x50xf32>
    %47 = tpu.matmul %1, %46, %cst_11 {dimension_numbers = #tpu.dot_dimension_numbers<[1], [0], [0], [1], [0, 0, 1, 1], [], []>} : vector<4x16xbf16>, vector<16x50xbf16>, vector<4x50xf32> -> vector<4x50xf32>
    %48 = arith.addf %47, %2 : vector<4x50xf32>
    %cst_12 = arith.constant 0.000000e+00 : f32
    %49 = vector.broadcast %cst_12 : f32 to vector<4x50xf32>
    %50 = arith.maximumf %48, %49 : vector<4x50xf32>
    %51 = arith.index_cast %c0_i32_8 : i32 to index
    %c0_13 = arith.constant 0 : index
    %c0_14 = arith.constant 0 : index
    %52 = vector.load %arg5[%51, %c0_13, %c0_14] : memref<1x4x50xf32, #tpu.memory_space<vmem>>, vector<1x4x50xf32>
    %53 = vector.shape_cast %52 : vector<1x4x50xf32> to vector<4x50xf32>
    %54 = vector.shape_cast %50 : vector<4x50xf32> to vector<1x4x50xf32>
    tpu.vector_store %arg5[%51, %c0_13, %c0_14], %54 {strides = array<i32>} : memref<1x4x50xf32, #tpu.memory_space<vmem>>, vector<1x4x50xf32>,
    %c1_i32_15 = arith.constant 1 : i32
    return
  }
  func.func @transform_0(%arg0: i32) -> (i32, i32, i32) {
    %c0_i32 = arith.constant 0 : i32
    %c0_i32_0 = arith.constant 0 : i32
    %c0_i32_1 = arith.constant 0 : i32
    return %arg0, %c0_i32, %c0_i32_0 : i32, i32, i32
  }
  func.func @transform_1(%arg0: i32) -> (i32, i32) {
    %c0_i32 = arith.constant 0 : i32
    %c0_i32_0 = arith.constant 0 : i32
    %c0_i32_1 = arith.constant 0 : i32
    return %c0_i32, %c0_i32_0 : i32, i32
  }
  func.func @transform_2(%arg0: i32) -> (i32, i32) {
    %c0_i32 = arith.constant 0 : i32
    %c0_i32_0 = arith.constant 0 : i32
    %c0_i32_1 = arith.constant 0 : i32
    return %c0_i32, %c0_i32_0 : i32, i32
  }
  func.func @transform_3(%arg0: i32) -> (i32, i32) {
    %c0_i32 = arith.constant 0 : i32
    %c0_i32_0 = arith.constant 0 : i32
    %c0_i32_1 = arith.constant 0 : i32
    return %c0_i32, %c0_i32_0 : i32, i32
  }
  func.func @transform_4(%arg0: i32) -> (i32, i32, i32) {
    %c0_i32 = arith.constant 0 : i32
    %c0_i32_0 = arith.constant 0 : i32
    %c0_i32_1 = arith.constant 0 : i32
    return %arg0, %c0_i32, %c0_i32_0 : i32, i32, i32
  }
}

module attributes {stable_mosaic.version = 11 : i64} {
  func.func @cpam_enc_kernel(%arg0: i32, %arg1: memref<1x4x256xf32, #tpu.memory_space<vmem>>, %arg2: memref<256x50xbf16, #tpu.memory_space<vmem>>, %arg3: memref<4x16xbf16, #tpu.memory_space<vmem>>, %arg4: memref<4x50xf32, #tpu.memory_space<vmem>>, %arg5: memref<1x4x50xf32, #tpu.memory_space<vmem>>) attributes {dimension_semantics = [#tpu.dimension_semantics<parallel>], iteration_bounds = array<i64: 2>, scalar_prefetch = 0 : i64, scratch_operands = 0 : i64, tpu.core_type = #tpu.core_type<tc>, window_params = [{transform_indices = @transform_0, window_bounds = array<i64: 1, 4, 256>}, {pipeline_mode = #tpu.pipeline_mode<synchronous>, transform_indices = @transform_1, window_bounds = array<i64: 256, 50>}, {pipeline_mode = #tpu.pipeline_mode<synchronous>, transform_indices = @transform_2, window_bounds = array<i64: 4, 16>}, {pipeline_mode = #tpu.pipeline_mode<synchronous>, transform_indices = @transform_3, window_bounds = array<i64: 4, 50>}, {transform_indices = @transform_4, window_bounds = array<i64: 1, 4, 50>}]} {
    %c0 = arith.constant 0 : index
    %c0_0 = arith.constant 0 : index
    %0 = vector.load %arg2[%c0, %c0_0] : memref<256x50xbf16, #tpu.memory_space<vmem>>, vector<256x50xbf16>
    %c0_1 = arith.constant 0 : index
    %c0_2 = arith.constant 0 : index
    %1 = vector.load %arg3[%c0_1, %c0_2] : memref<4x16xbf16, #tpu.memory_space<vmem>>, vector<4x16xbf16>
    %c0_3 = arith.constant 0 : index
    %c0_4 = arith.constant 0 : index
    %2 = vector.load %arg4[%c0_3, %c0_4] : memref<4x50xf32, #tpu.memory_space<vmem>>, vector<4x50xf32>
    %3 = tpu.iota {dimensions = array<i32: 1>} : vector<1x50xi32>
    %c0_i32 = arith.constant 0 : i32
    %4 = vector.broadcast %c0_i32 : i32 to vector<1x50xi32>
    %5 = arith.cmpi sge, %3, %4 : vector<1x50xi32>
    %c1_i32 = arith.constant 1 : i32
    %6 = vector.broadcast %c1_i32 : i32 to vector<1x50xi32>
    %7 = arith.cmpi slt, %3, %6 : vector<1x50xi32>
    %8 = arith.andi %5, %7 : vector<1x50xi1>
    %9 = arith.extui %8 : vector<1x50xi1> to vector<1x50xi32>
    %10 = arith.sitofp %9 : vector<1x50xi32> to vector<1x50xf32>
    %c1_i32_5 = arith.constant 1 : i32
    %11 = vector.broadcast %c1_i32_5 : i32 to vector<1x50xi32>
    %12 = arith.cmpi sge, %3, %11 : vector<1x50xi32>
    %c5_i32 = arith.constant 5 : i32
    %13 = vector.broadcast %c5_i32 : i32 to vector<1x50xi32>
    %14 = arith.cmpi slt, %3, %13 : vector<1x50xi32>
    %15 = arith.andi %12, %14 : vector<1x50xi1>
    %16 = arith.extui %15 : vector<1x50xi1> to vector<1x50xi32>
    %17 = arith.sitofp %16 : vector<1x50xi32> to vector<1x50xf32>
    %c5_i32_6 = arith.constant 5 : i32
    %18 = vector.broadcast %c5_i32_6 : i32 to vector<1x50xi32>
    %19 = arith.cmpi sge, %3, %18 : vector<1x50xi32>
    %c14_i32 = arith.constant 14 : i32
    %20 = vector.broadcast %c14_i32 : i32 to vector<1x50xi32>
    %21 = arith.cmpi slt, %3, %20 : vector<1x50xi32>
    %22 = arith.andi %19, %21 : vector<1x50xi1>
    %23 = arith.extui %22 : vector<1x50xi1> to vector<1x50xi32>
    %24 = arith.sitofp %23 : vector<1x50xi32> to vector<1x50xf32>
    %c14_i32_7 = arith.constant 14 : i32
    %25 = vector.broadcast %c14_i32_7 : i32 to vector<1x50xi32>
    %26 = arith.cmpi sge, %3, %25 : vector<1x50xi32>
    %c50_i32 = arith.constant 50 : i32
    %27 = vector.broadcast %c50_i32 : i32 to vector<1x50xi32>
    %28 = arith.cmpi slt, %3, %27 : vector<1x50xi32>
    %29 = arith.andi %26, %28 : vector<1x50xi1>
    %30 = arith.extui %29 : vector<1x50xi1> to vector<1x50xi32>
    %31 = arith.sitofp %30 : vector<1x50xi32> to vector<1x50xf32>
    %c0_i32_8 = arith.constant 0 : i32
    %32 = arith.index_cast %c0_i32_8 : i32 to index
    %c0_9 = arith.constant 0 : index
    %c0_10 = arith.constant 0 : index
    %33 = vector.load %arg1[%32, %c0_9, %c0_10] : memref<1x4x256xf32, #tpu.memory_space<vmem>>, vector<1x4x256xf32>
    %34 = vector.shape_cast %33 : vector<1x4x256xf32> to vector<4x256xf32>
    %35 = arith.truncf %34 : vector<4x256xf32> to vector<4x256xbf16>
    %cst = arith.constant dense<0.000000e+00> : vector<4x50xf32>
    %36 = tpu.matmul %35, %0, %cst {dimension_numbers = #tpu.dot_dimension_numbers<[1], [0], [0], [1], [0, 0, 1, 1], [], []>} : vector<4x256xbf16>, vector<256x50xbf16>, vector<4x50xf32> -> vector<4x50xf32>
    %37 = vector.broadcast %10 : vector<1x50xf32> to vector<4x50xf32>
    %38 = arith.mulf %36, %37 : vector<4x50xf32>
    %39 = vector.broadcast %17 : vector<1x50xf32> to vector<4x50xf32>
    %40 = arith.mulf %36, %39 : vector<4x50xf32>
    %41 = vector.broadcast %24 : vector<1x50xf32> to vector<4x50xf32>
    %42 = arith.mulf %36, %41 : vector<4x50xf32>
    %43 = vector.broadcast %31 : vector<1x50xf32> to vector<4x50xf32>
    %44 = arith.mulf %36, %43 : vector<4x50xf32>
    %45 = tpu.concatenate %38, %40, %42, %44 in 0 : vector<4x50xf32>, vector<4x50xf32>, vector<4x50xf32>, vector<4x50xf32> -> vector<16x50xf32>
    %46 = arith.truncf %45 : vector<16x50xf32> to vector<16x50xbf16>
    %cst_11 = arith.constant dense<0.000000e+00> : vector<4x50xf32>
    %47 = tpu.matmul %1, %46, %cst_11 {dimension_numbers = #tpu.dot_dimension_numbers<[1], [0], [0], [1], [0, 0, 1, 1], [], []>} : vector<4x16xbf16>, vector<16x50xbf16>, vector<4x50xf32> -> vector<4x50xf32>
    %48 = arith.addf %47, %2 : vector<4x50xf32>
    %cst_12 = arith.constant 0.000000e+00 : f32
    %49 = vector.broadcast %cst_12 : f32 to vector<4x50xf32>
    %50 = arith.maximumf %48, %49 : vector<4x50xf32>
    %51 = arith.index_cast %c0_i32_8 : i32 to index
    %c0_13 = arith.constant 0 : index
    %c0_14 = arith.constant 0 : index
    %52 = vector.load %arg5[%51, %c0_13, %c0_14] : memref<1x4x50xf32, #tpu.memory_space<vmem>>, vector<1x4x50xf32>
    %53 = vector.shape_cast %52 : vector<1x4x50xf32> to vector<4x50xf32>
    %54 = vector.shape_cast %50 : vector<4x50xf32> to vector<1x4x50xf32>
    tpu.vector_store %arg5[%51, %c0_13, %c0_14], %54 {strides = array<i32>} : memref<1x4x50xf32, #tpu.memory_space<vmem>>, vector<1x4x50xf32>,
    %c1_i32_15 = arith.constant 1 : i32
    return
  }
  func.func @transform_0(%arg0: i32) -> (i32, i32, i32) {
    %c0_i32 = arith.constant 0 : i32
    %c0_i32_0 = arith.constant 0 : i32
    %c0_i32_1 = arith.constant 0 : i32
    return %arg0, %c0_i32, %c0_i32_0 : i32, i32, i32
  }
  func.func @transform_1(%arg0: i32) -> (i32, i32) {
    %c0_i32 = arith.constant 0 : i32
    %c0_i32_0 = arith.constant 0 : i32
    %c0_i32_1 = arith.constant 0 : i32
    return %c0_i32, %c0_i32_0 : i32, i32
  }
  func.func @transform_2(%arg0: i32) -> (i32, i32) {
    %c0_i32 = arith.constant 0 : i32
    %c0_i32_0 = arith.constant 0 : i32
    %c0_i32_1 = arith.constant 0 : i32
    return %c0_i32, %c0_i32_0 : i32, i32
  }
  func.func @transform_3(%arg0: i32) -> (i32, i32) {
    %c0_i32 = arith.constant 0 : i32
    %c0_i32_0 = arith.constant 0 : i32
    %c0_i32_1 = arith.constant 0 : i32
    return %c0_i32, %c0_i32_0 : i32, i32
  }
  func.func @transform_4(%arg0: i32) -> (i32, i32, i32) {
    %c0_i32 = arith.constant 0 : i32
    %c0_i32_0 = arith.constant 0 : i32
    %c0_i32_1 = arith.constant 0 : i32
    return %arg0, %c0_i32, %c0_i32_0 : i32, i32, i32
  }
}

</mosaic_0001>

<llo_original>
// kernel: tpu_custom_call.1
$region0: #{tpu_custom_call.1}
  #allocation0 [shape = 'u32[]', space=smem, size = 0x4, offset = 0x4, fixed_abs, tag = 'smem constant byte address 0x4 - core index']
  #allocation1 [shape = 'u32[144,128]{1,0:T(1,128)}', space=vmem, size = 0x12000, scoped, tag = 'internal scratch']
  %s0 = inlined_call_operand.vmem [shape: f32[2,4,256], index: 0, kind: input, shape index: {}]
  %s1 = inlined_call_operand.vmem [shape: bf16[256,50], index: 1, kind: input, shape index: {}]
  %s2 = inlined_call_operand.vmem [shape: bf16[4,16], index: 2, kind: input, shape index: {}]
  %s3 = inlined_call_operand.vmem [shape: f32[4,50], index: 3, kind: input, shape index: {}]
  %s4 = inlined_call_operand.hbm [shape: f32[2,4,50], index: 4, kind: output, shape index: {}]
  %s5 = sld [smem:[#allocation0]]
  $region49: #{tpu_custom_call.1} parent=0
    _
  %s7 = ssub.s32 1, %s5
  %s8 = scalar_select 0, %s7, %s5
  $region1: #{tpu_custom_call.1} parent=0
    #allocation2 [shape = 'u8[4096]{0}', space=vmem, size = 0x1000, scoped, tag = 'output window, operand 0']
    #allocation3 [shape = 's32[2]{0}', space=sflag, size = 0x8, scoped, tag = 'scoped memory for tpu_custom_call.1']
    %9 = vsyncpa [#allocation3], 0
    %s10 = scalar_lea.sflag [#allocation3], 1
    %11 = vsyncpa %s10, 0
    loop: start=0, step=1, limit=4
    $region2: #{tpu_custom_call.1} parent=1 // loop_pre_header
      _
    $region3: #{tpu_custom_call.1} parent=1 // loop_header
      %s13 = sphi 0, %s17
      %p14 = scmp.ge.s32.totalorder %s13, 4
      %s23 = sphi 0, %s25
      %s26 = sphi 0, %s23
      %s27 = sphi 0, %s26
      %s43 = sphi 0, %s27
      %s47 = sphi 0, %s47
      %s49 = sphi 0, %s47
      %s50 = sphi 0, %s49
      %s64 = sphi 0, %s50
      %s68 = sphi 0, %s68
      %s70 = sphi 0, %s68
      %s71 = sphi 0, %s70
      %s85 = sphi 0, %s71
      %s89 = sphi 0, %s89
      %s91 = sphi 0, %s89
      %s92 = sphi 0, %s91
      %s106 = sphi 0, %s92
      %s112 = sphi 0, %s114
      %s115 = sphi 0, %s112
      %s116 = sphi 0, %s115
      %s132 = sphi 0, %s116
    $region4: #{tpu_custom_call.1} parent=1 // loop_header_branch
      %16 = sbr.rel (%p14) target = $region8
    $region5: #{tpu_custom_call.1} parent=1 // loop_body
      %s18 = ssub.s32 %s13, 1
      %s19 = ssub.s32 %s13, 2
      %s20 = sadd.s32 %s13, 1
      %s21 = ssub.s32 %s13, %s20
      %p22 = scmp.eq.s32.totalorder %s21, 0
      %s24 = sadd.s32 %s23, 1
      %s25 = scalar_select %p22, %s23, %s24
      %p28 = pneg %p22
      %p29 = scmp.eq.s32.totalorder %s13, 1
      %p30 = por %p28, %p29
      %p31 = scmp.ne.s32.totalorder %s23, %s26
      %p32 = scmp.eq.s32.totalorder %s13, 0
      %p33 = por %p31, %p32
      %p34 = scmp.ne.s32.totalorder %s23, %s26
      %p35 = scmp.eq.s32.totalorder %s18, 1
      %p36 = por %p34, %p35
      %p37 = scmp.ne.s32.totalorder %s26, %s27
      %p38 = scmp.eq.s32.totalorder %s18, 0
      %p39 = por %p37, %p38
      %p40 = scmp.ne.s32.totalorder %s26, %s27
      %p41 = scmp.eq.s32.totalorder %s19, 1
      %p42 = por %p40, %p41
      %p44 = scmp.ne.s32.totalorder %s27, %s43
      %p45 = scmp.eq.s32.totalorder %s19, 0
      %p46 = por %p44, %p45
      %s48 = sadd.s32 %s47, 1
      %p51 = scmp.eq.s32.totalorder %s13, 1
      %p52 = scmp.ne.s32.totalorder %s47, %s49
      %p53 = scmp.eq.s32.totalorder %s13, 0
      %p54 = por %p52, %p53
      %p55 = scmp.ne.s32.totalorder %s47, %s49
      %p56 = scmp.eq.s32.totalorder %s18, 1
      %p57 = por %p55, %p56
      %p58 = scmp.ne.s32.totalorder %s49, %s50
      %p59 = scmp.eq.s32.totalorder %s18, 0
      %p60 = por %p58, %p59
      %p61 = scmp.ne.s32.totalorder %s49, %s50
      %p62 = scmp.eq.s32.totalorder %s19, 1
      %p63 = por %p61, %p62
      %p65 = scmp.ne.s32.totalorder %s50, %s64
      %p66 = scmp.eq.s32.totalorder %s19, 0
      %p67 = por %p65, %p66
      %s69 = sadd.s32 %s68, 1
      %p72 = scmp.eq.s32.totalorder %s13, 1
      %p73 = scmp.ne.s32.totalorder %s68, %s70
      %p74 = scmp.eq.s32.totalorder %s13, 0
      %p75 = por %p73, %p74
      %p76 = scmp.ne.s32.totalorder %s68, %s70
      %p77 = scmp.eq.s32.totalorder %s18, 1
      %p78 = por %p76, %p77
      %p79 = scmp.ne.s32.totalorder %s70, %s71
      %p80 = scmp.eq.s32.totalorder %s18, 0
      %p81 = por %p79, %p80
      %p82 = scmp.ne.s32.totalorder %s70, %s71
      %p83 = scmp.eq.s32.totalorder %s19, 1
      %p84 = por %p82, %p83
      %p86 = scmp.ne.s32.totalorder %s71, %s85
      %p87 = scmp.eq.s32.totalorder %s19, 0
      %p88 = por %p86, %p87
      %s90 = sadd.s32 %s89, 1
      %p93 = scmp.eq.s32.totalorder %s13, 1
      %p94 = scmp.ne.s32.totalorder %s89, %s91
      %p95 = scmp.eq.s32.totalorder %s13, 0
      %p96 = por %p94, %p95
      %p97 = scmp.ne.s32.totalorder %s89, %s91
      %p98 = scmp.eq.s32.totalorder %s18, 1
      %p99 = por %p97, %p98
      %p100 = scmp.ne.s32.totalorder %s91, %s92
      %p101 = scmp.eq.s32.totalorder %s18, 0
      %p102 = por %p100, %p101
      %p103 = scmp.ne.s32.totalorder %s91, %s92
      %p104 = scmp.eq.s32.totalorder %s19, 1
      %p105 = por %p103, %p104
      %p107 = scmp.ne.s32.totalorder %s92, %s106
      %p108 = scmp.eq.s32.totalorder %s19, 0
      %p109 = por %p107, %p108
      %s110 = ssub.s32 %s13, %s20
      %p111 = scmp.eq.s32.totalorder %s110, 0
      %s113 = sadd.s32 %s112, 1
      %s114 = scalar_select %p111, %s112, %s113
      %p117 = pneg %p111
      %p118 = scmp.eq.s32.totalorder %s13, 1
      %p119 = por %p117, %p118
      %p120 = scmp.ne.s32.totalorder %s112, %s115
      %p121 = scmp.eq.s32.totalorder %s13, 0
      %p122 = por %p120, %p121
      %p123 = scmp.ne.s32.totalorder %s112, %s115
      %p124 = scmp.eq.s32.totalorder %s18, 1
      %p125 = por %p123, %p124
      %p126 = scmp.ne.s32.totalorder %s115, %s116
      %p127 = scmp.eq.s32.totalorder %s18, 0
      %p128 = por %p126, %p127
      %p129 = scmp.ne.s32.totalorder %s115, %s116
      %p130 = scmp.eq.s32.totalorder %s19, 1
      %p131 = por %p129, %p130
      %p133 = scmp.ne.s32.totalorder %s116, %s132
      %p134 = scmp.eq.s32.totalorder %s19, 0
      %p135 = por %p133, %p134
      %p136 = scmp.le.s32.totalorder 1, %s13
      %p137 = scmp.lt.s32.totalorder %s13, 3
      %p138 = pnand %p136, %p137
      %p139 = pneg %p138
      // Predicated region
      $region9: #{tpu_custom_call.1} parent=5 // pred_check
        _
      $region10: #{tpu_custom_call.1} parent=5 // pred_check_branch
        %141 = sbr.rel (%p138) target = $region12
      $region11: #{tpu_custom_call.1} parent=5 // pred_region
        %s142 = ssub.s32 %s13, 1
        // Predicated region
        $region13: #{tpu_custom_call.1} parent=11 // pred_check
          %p143 = pneg %p60
        $region14: #{tpu_custom_call.1} parent=11 // pred_check_branch
          %145 = sbr.rel (%p143) target = $region16
        $region15: #{tpu_custom_call.1} parent=11 // pred_region
          _
        $region16: #{tpu_custom_call.1} parent=11 // pred_fallthru
          _
        // Predicated region
        $region17: #{tpu_custom_call.1} parent=11 // pred_check
          %p146 = pneg %p81
        $region18: #{tpu_custom_call.1} parent=11 // pred_check_branch
          %148 = sbr.rel (%p146) target = $region20
        $region19: #{tpu_custom_call.1} parent=11 // pred_region
          _
        $region20: #{tpu_custom_call.1} parent=11 // pred_fallthru
          _
        // Predicated region
        $region21: #{tpu_custom_call.1} parent=11 // pred_check
          %p149 = pneg %p102
        $region22: #{tpu_custom_call.1} parent=11 // pred_check_branch
          %151 = sbr.rel (%p149) target = $region24
        $region23: #{tpu_custom_call.1} parent=11 // pred_region
          _
        $region24: #{tpu_custom_call.1} parent=11 // pred_fallthru
          _
      $region12: #{tpu_custom_call.1} parent=5 // pred_fallthru
        _
      %p152 = scmp.lt.s32.totalorder %s13, 2
      // Predicated region
      $region25: #{tpu_custom_call.1} parent=5 // pred_check
        %p153 = pneg %p152
      $region26: #{tpu_custom_call.1} parent=5 // pred_check_branch
        %155 = sbr.rel (%p153) target = $region28
      $region27: #{tpu_custom_call.1} parent=5 // pred_region
        // Predicated region
        $region29: #{tpu_custom_call.1} parent=27 // pred_check
          %p156 = pneg %p33
        $region30: #{tpu_custom_call.1} parent=27 // pred_check_branch
          %158 = sbr.rel (%p156) target = $region32
        $region31: #{tpu_custom_call.1} parent=27 // pred_region
          %p159 = scmp.lt.s32.totalorder %s13, 1
          %s160 = scalar_select %p159, %s13, 1
          %s161 = smul.addr %s160, 2
          %s162 = smul.addr %s161, 4
          %s163 = scalar_lea.vmem %s0, %s162
        $region32: #{tpu_custom_call.1} parent=27 // pred_fallthru
          _
      $region28: #{tpu_custom_call.1} parent=5 // pred_fallthru
        _
      %p164 = scmp.le.s32.totalorder 1, %s13
      %p165 = scmp.lt.s32.totalorder %s13, 3
      %p166 = pnand %p164, %p165
      %p167 = pneg %p166
      // Predicated region
      $region33: #{tpu_custom_call.1} parent=5 // pred_check
        _
      $region34: #{tpu_custom_call.1} parent=5 // pred_check_branch
        %169 = sbr.rel (%p166) target = $region36
      $region35: #{tpu_custom_call.1} parent=5 // pred_region
        %s170 = ssub.s32 %s13, 1
        %p171 = scmp.lt.s32.totalorder %s18, 1
        %s172 = scalar_select %p171, %s18, 1
        %s173 = smul.addr %s172, 2
        %s174 = smul.addr %s173, 4
        %s175 = scalar_lea.vmem %s0, %s174
        %p176 = pneg %p39
        %p177 = pneg %p36
        %p178 = pneg %p60
        %p179 = pneg %p57
        %p180 = pneg %p81
        %p181 = pneg %p78
        %p182 = pneg %p102
        %p183 = pneg %p99
        %p184 = pneg %p128
        %p185 = pneg %p125
        %s186 = sand.u32 %s115, 1
        %s187 = scalar_lea.sflag [#allocation3], %s186
        %s188 = sand.u32 %s115, 1
        %s189 = smul.addr %s188, 4
        %s190 = scalar_lea.vmem [#allocation2], %s189
        %p191 = scmp.lt.s32.totalorder %s18, 1
        %s192 = scalar_select %p191, %s18, 1
        %s193 = smul.addr %s192, 2
        %s194 = smul.addr %s193, 4
        %s195 = scalar_lea.vmem %s0, %s194
        %v197 = vld [vmem:[%s1] sm:$0xf]
        %v198 = vld [vmem:[%s1 + $0x4] sm:$0xf]
        %v199 = vld [vmem:[%s1 + $0x8] sm:$0xf]
        %v200 = vld [vmem:[%s1 + $0xc] sm:$0xf]
        %v201 = vld [vmem:[%s1 + $0x10] sm:$0xf]
        %v202 = vld [vmem:[%s1 + $0x14] sm:$0xf]
        %v203 = vld [vmem:[%s1 + $0x18] sm:$0xf]
        %v204 = vld [vmem:[%s1 + $0x1c] sm:$0xf]
        %v205 = vld [vmem:[%s1 + $0x20] sm:$0xf]
        %v206 = vld [vmem:[%s1 + $0x24] sm:$0xf]
        %v207 = vld [vmem:[%s1 + $0x28] sm:$0xf]
        %v208 = vld [vmem:[%s1 + $0x2c] sm:$0xf]
        %v209 = vld [vmem:[%s1 + $0x30] sm:$0xf]
        %v210 = vld [vmem:[%s1 + $0x34] sm:$0xf]
        %v211 = vld [vmem:[%s1 + $0x38] sm:$0xf]
        %v212 = vld [vmem:[%s1 + $0x3c] sm:$0xf]
        %v213 = vld [vmem:[%s1 + $0x40] sm:$0xf]
        %v214 = vld [vmem:[%s1 + $0x44] sm:$0xf]
        %v215 = vld [vmem:[%s1 + $0x48] sm:$0xf]
        %v216 = vld [vmem:[%s1 + $0x4c] sm:$0xf]
        %v217 = vld [vmem:[%s1 + $0x50] sm:$0xf]
        %v218 = vld [vmem:[%s1 + $0x54] sm:$0xf]
        %v219 = vld [vmem:[%s1 + $0x58] sm:$0xf]
        %v220 = vld [vmem:[%s1 + $0x5c] sm:$0xf]
        %v221 = vld [vmem:[%s1 + $0x60] sm:$0xf]
        %v222 = vld [vmem:[%s1 + $0x64] sm:$0xf]
        %v223 = vld [vmem:[%s1 + $0x68] sm:$0xf]
        %v224 = vld [vmem:[%s1 + $0x6c] sm:$0xf]
        %v225 = vld [vmem:[%s1 + $0x70] sm:$0xf]
        %v226 = vld [vmem:[%s1 + $0x74] sm:$0xf]
        %v227 = vld [vmem:[%s1 + $0x78] sm:$0xf]
        %v228 = vld [vmem:[%s1 + $0x7c] sm:$0xf]
        %v229 = vld [vmem:[%s2] sm:$0x3]
        %v230 = vld [vmem:[%s3] sm:$0xf]
        %v231 = vlaneseq
        %v232 = vand.u32 %v231, 127
        %vm233 = vcmp.ge.s32.totalorder %v232, 0
        %vm234 = vcmp.lt.s32.totalorder %v232, 1
        %vm235 = vmand %vm233, %vm234
        %v236 = vsel %vm235, 1, 0
        %v237 = vcvt.s32.f32 %v236
        %vm238 = vcmp.ge.s32.totalorder %v232, 1
        %vm239 = vcmp.lt.s32.totalorder %v232, 5
        %vm240 = vmand %vm238, %vm239
        %v241 = vsel %vm240, 1, 0
        %v242 = vcvt.s32.f32 %v241
        %vm243 = vcmp.ge.s32.totalorder %v232, 5
        %vm244 = vcmp.lt.s32.totalorder %v232, 14
        %vm245 = vmand %vm243, %vm244
        %v246 = vsel %vm245, 1, 0
        %v247 = vcvt.s32.f32 %v246
        %vm248 = vcmp.ge.s32.totalorder %v232, 14
        %vm249 = vcmp.lt.s32.totalorder %v232, 50
        %vm250 = vmand %vm248, %vm249
        %v251 = vsel %vm250, 1, 0
        %v252 = vcvt.s32.f32 %v251
        %v253 = vld [vmem:[%s195] sm:$0xff]
        %v255 = vcombine.high %v253, %v253
        %v257 = vpack.c.bf16 %v253, %v253
        %v258 = vpack.c.bf16 %v255, %v255
        %v291 = vunpack.c.l.b16 %v197
        %v292 = vunpack.c.l.b16 %v198
        %v293 = vunpack.c.l.b16 %v199
        %v294 = vunpack.c.l.b16 %v200
        %v295 = vunpack.c.l.b16 %v201
        %v296 = vunpack.c.l.b16 %v202
        %v297 = vunpack.c.l.b16 %v203
        %v298 = vunpack.c.l.b16 %v204
        %v299 = vunpack.c.l.b16 %v205
        %v300 = vunpack.c.l.b16 %v206
        %v301 = vunpack.c.l.b16 %v207
        %v302 = vunpack.c.l.b16 %v208
        %v303 = vunpack.c.l.b16 %v209
        %v304 = vunpack.c.l.b16 %v210
        %v305 = vunpack.c.l.b16 %v211
        %v306 = vunpack.c.l.b16 %v212
        %v307 = vunpack.c.l.b16 %v213
        %v308 = vunpack.c.l.b16 %v214
        %v309 = vunpack.c.l.b16 %v215
        %v310 = vunpack.c.l.b16 %v216
        %v311 = vunpack.c.l.b16 %v217
        %v312 = vunpack.c.l.b16 %v218
        %v313 = vunpack.c.l.b16 %v219
        %v314 = vunpack.c.l.b16 %v220
        %v315 = vunpack.c.l.b16 %v221
        %v316 = vunpack.c.l.b16 %v222
        %v317 = vunpack.c.l.b16 %v223
        %v318 = vunpack.c.l.b16 %v224
        %v319 = vunpack.c.l.b16 %v225
        %v320 = vunpack.c.l.b16 %v226
        %v321 = vunpack.c.l.b16 %v227
        %v322 = vunpack.c.l.b16 %v228
        %v323 = vpack.c.b16 %v292, %v291
        %v324 = vpack.c.b16 %v294, %v293
        %v325 = vpack.c.b16 %v296, %v295
        %v326 = vpack.c.b16 %v298, %v297
        %v327 = vpack.c.b16 %v300, %v299
        %v328 = vpack.c.b16 %v302, %v301
        %v329 = vpack.c.b16 %v304, %v303
        %v330 = vpack.c.b16 %v306, %v305
        %v331 = vpack.c.b16 %v308, %v307
        %v332 = vpack.c.b16 %v310, %v309
        %v333 = vpack.c.b16 %v312, %v311
        %v334 = vpack.c.b16 %v314, %v313
        %v335 = vpack.c.b16 %v316, %v315
        %v336 = vpack.c.b16 %v318, %v317
        %v337 = vpack.c.b16 %v320, %v319
        %v338 = vpack.c.b16 %v322, %v321
        %355 = vmatprep.subr.bf16.mxu0 0
        %356 = vmatpush1.bf16.msra.mxu0 %v330
        %357 = vmatprep.subr.bf16.mxu0 0
        %358 = vmatpush1.bf16.msra.mxu0 %v329
        %359 = vmatprep.subr.bf16.mxu0 0
        %360 = vmatpush1.bf16.msra.mxu0 %v328
        %361 = vmatprep.subr.bf16.mxu0 0
        %362 = vmatpush1.bf16.msra.mxu0 %v327
        %363 = vmatprep.subr.bf16.mxu0 0
        %364 = vmatpush1.bf16.msra.mxu0 %v326
        %365 = vmatprep.subr.bf16.mxu0 0
        %366 = vmatpush1.bf16.msra.mxu0 %v325
        %367 = vmatprep.subr.bf16.mxu0 0
        %368 = vmatpush1.bf16.msra.mxu0 %v324
        %369 = vmatprep.subr.bf16.mxu0 0
        %370 = vmatpush1.bf16.msra.mxu0 %v323
        %371 = vmatprep.subr.bf16.mxu0 0
        %372 = vmatpush2.bf16.msra.mxu0 %v338
        %373 = vmatprep.subr.bf16.mxu0 0
        %374 = vmatpush2.bf16.msra.mxu0 %v337
        %375 = vmatprep.subr.bf16.mxu0 0
        %376 = vmatpush2.bf16.msra.mxu0 %v336
        %377 = vmatprep.subr.bf16.mxu0 0
        %378 = vmatpush2.bf16.msra.mxu0 %v335
        %379 = vmatprep.subr.bf16.mxu0 0
        %380 = vmatpush2.bf16.msra.mxu0 %v334
        %381 = vmatprep.subr.bf16.mxu0 0
        %382 = vmatpush2.bf16.msra.mxu0 %v333
        %383 = vmatprep.subr.bf16.mxu0 0
        %384 = vmatpush2.bf16.msra.mxu0 %v332
        %385 = vmatprep.subr.bf16.mxu0 0
        %386 = vmatpush2.bf16.msra.mxu0 %v331
        %387 = vmatprep.mubr.bf16.mxu0 %v258
        %388 = vmatmul.mubr.bf16.gmra.mxu0 %v257
        %v389 = vpop.f32.mrf.mxu0
        %v390 = vadd.f32 0.0, %v389
        %v391 = vpop.f32.mrf.mxu0
        %v392 = vpop.f32.mrf.mxu0
        %v393 = vpop.f32.mrf.mxu0
        %394 = vdwg.mxu0
        %v395 = vmul.f32 %v390, %v237
        %v396 = vmul.f32 %v390, %v242
        %v397 = vmul.f32 %v390, %v247
        %v398 = vmul.f32 %v390, %v252
        %v400 = vrot.slane %v396, 4
        %v403 = vrot.slane %v398, 4
        %vm405 = vcmask 1043456
        %v406 = vsel %vm405, %v395, %v400
        %v407 = vsel %vm405, %v397, %v403
        %v408 = vpack.c.bf16 %v407, %v406
        %vm409 = vcmask 130048
        %v411 = vsel %vm409, %v229, 0
        %413 = vmatprep.subr.bf16.mxu0 0
        %414 = vmatpush1.bf16.msra.mxu0 0
        %415 = vmatprep.subr.bf16.mxu0 0
        %416 = vmatpush1.bf16.msra.mxu0 0
        %417 = vmatprep.subr.bf16.mxu0 0
        %418 = vmatpush1.bf16.msra.mxu0 0
        %419 = vmatprep.subr.bf16.mxu0 0
        %420 = vmatpush1.bf16.msra.mxu0 0
        %421 = vmatprep.subr.bf16.mxu0 0
        %422 = vmatpush1.bf16.msra.mxu0 0
        %423 = vmatprep.subr.bf16.mxu0 0
        %424 = vmatpush1.bf16.msra.mxu0 0
        %425 = vmatprep.subr.bf16.mxu0 0
        %426 = vmatpush1.bf16.msra.mxu0 0
        %427 = vmatprep.subr.bf16.mxu0 0
        %428 = vmatpush1.bf16.msra.mxu0 %v408
        %429 = vmatprep.subr.bf16.mxu0 0
        %430 = vmatpush2.bf16.msra.mxu0 0
        %431 = vmatprep.subr.bf16.mxu0 0
        %432 = vmatpush2.bf16.msra.mxu0 0
        %433 = vmatprep.subr.bf16.mxu0 0
        %434 = vmatpush2.bf16.msra.mxu0 0
        %435 = vmatprep.subr.bf16.mxu0 0
        %436 = vmatpush2.bf16.msra.mxu0 0
        %437 = vmatprep.subr.bf16.mxu0 0
        %438 = vmatpush2.bf16.msra.mxu0 0
        %439 = vmatprep.subr.bf16.mxu0 0
        %440 = vmatpush2.bf16.msra.mxu0 0
        %441 = vmatprep.subr.bf16.mxu0 0
        %442 = vmatpush2.bf16.msra.mxu0 0
        %443 = vmatprep.subr.bf16.mxu0 0
        %444 = vmatpush2.bf16.msra.mxu0 0
        %445 = vmatprep.mubr.bf16.mxu0 0
        %446 = vmatmul.mubr.bf16.gmra.mxu0 %v411
        %v447 = vpop.f32.mrf.mxu0
        %v448 = vadd.f32 %v230, %v447
        %v449 = vpop.f32.mrf.mxu0
        %v450 = vpop.f32.mrf.mxu0
        %v451 = vpop.f32.mrf.mxu0
        %452 = vdwg.mxu0
        %v453 = vmax.f32 %v448, 0.0
        %vm454 = vcmask 404480
        %455 = vst.msk [vmem:[%s190] sm:$0xf] %vm454, %v453
        %s456 = sand.u32 %s115, 1
        %s457 = scalar_lea.sflag [#allocation3], %s456
        %s458 = sand.u32 %s115, 1
        %s459 = smul.addr %s458, 4
        %s460 = scalar_lea.vmem [#allocation2], %s459
        // Predicated region
        $region37: #{tpu_custom_call.1} parent=35 // pred_check
          %p461 = pneg %p125
        $region38: #{tpu_custom_call.1} parent=35 // pred_check_branch
          %463 = sbr.rel (%p461) target = $region40
        $region39: #{tpu_custom_call.1} parent=35 // pred_region
          %s465 = ssub.s32 64, 64
          %466 = vsyncadd %s457, %s465
          %s467 = smul.addr %s18, 64
          %s468 = scalar_lea.hbm %s4, %s467
          %s470 = sshll.u32 %s460, 4
          %s471 = int_to_ptr.vmem [resolvable:$true] %s470
          %473 = dma.vmem_to_hbm [thread:$0]  %s471, 64, %s468, %s457
        $region40: #{tpu_custom_call.1} parent=35 // pred_fallthru
          _
      $region36: #{tpu_custom_call.1} parent=5 // pred_fallthru
        _
      %p474 = scmp.le.s32.totalorder 2, %s13
      // Predicated region
      $region41: #{tpu_custom_call.1} parent=5 // pred_check
        %p475 = pneg %p474
      $region42: #{tpu_custom_call.1} parent=5 // pred_check_branch
        %477 = sbr.rel (%p475) target = $region44
      $region43: #{tpu_custom_call.1} parent=5 // pred_region
        %s478 = ssub.s32 %s13, 2
        // Predicated region
        $region45: #{tpu_custom_call.1} parent=43 // pred_check
          %p479 = pneg %p131
        $region46: #{tpu_custom_call.1} parent=43 // pred_check_branch
          %481 = sbr.rel (%p479) target = $region48
        $region47: #{tpu_custom_call.1} parent=43 // pred_region
          %s482 = sand.u32 %s116, 1
          %s483 = scalar_lea.sflag [#allocation3], %s482
          %s484 = sand.u32 %s116, 1
          %s485 = smul.addr %s484, 4
          %s486 = scalar_lea.vmem [#allocation2], %s485
          %487 = dma.done %s483, 64
        $region48: #{tpu_custom_call.1} parent=43 // pred_fallthru
          _
      $region44: #{tpu_custom_call.1} parent=5 // pred_fallthru
        _
    $region6: #{tpu_custom_call.1} parent=1 // loop_footer
      %s17 = sadd.s32 1, %s13
    $region7: #{tpu_custom_call.1} parent=1 // loop_footer_branch
      %12 = sbr.rel target = $region3
    $region8: #{tpu_custom_call.1} parent=1 // loop_exit
      _
    %488 = vsyncpa [#allocation3], 1
    %s489 = scalar_lea.sflag [#allocation3], 1
    %490 = vsyncpa %s489, 1

// kernel: tpu_custom_call.1
$region0: #{tpu_custom_call.1}
  #allocation0 [shape = 'u32[]', space=smem, size = 0x4, offset = 0x4, fixed_abs, tag = 'smem constant byte address 0x4 - core index']
  #allocation1 [shape = 'u32[144,128]{1,0:T(1,128)}', space=vmem, size = 0x12000, scoped, tag = 'internal scratch']
  %s0 = inlined_call_operand.vmem [shape: f32[2,4,256], index: 0, kind: input, shape index: {}]
  %s1 = inlined_call_operand.vmem [shape: bf16[256,50], index: 1, kind: input, shape index: {}]
  %s2 = inlined_call_operand.vmem [shape: bf16[4,16], index: 2, kind: input, shape index: {}]
  %s3 = inlined_call_operand.vmem [shape: f32[4,50], index: 3, kind: input, shape index: {}]
  %s4 = inlined_call_operand.hbm [shape: f32[2,4,50], index: 4, kind: output, shape index: {}]
  %s5 = sld [smem:[#allocation0]]
  $region49: #{tpu_custom_call.1} parent=0
    _
  %s7 = ssub.s32 1, %s5
  %s8 = scalar_select 0, %s7, %s5
  $region1: #{tpu_custom_call.1} parent=0
    #allocation2 [shape = 'u8[4096]{0}', space=vmem, size = 0x1000, scoped, tag = 'output window, operand 0']
    #allocation3 [shape = 's32[2]{0}', space=sflag, size = 0x8, scoped, tag = 'scoped memory for tpu_custom_call.1']
    %9 = vsyncpa [#allocation3], 0
    %s10 = scalar_lea.sflag [#allocation3], 1
    %11 = vsyncpa %s10, 0
    loop: start=0, step=1, limit=4
    $region2: #{tpu_custom_call.1} parent=1 // loop_pre_header
      _
    $region3: #{tpu_custom_call.1} parent=1 // loop_header
      %s13 = sphi 0, %s17
      %p14 = scmp.ge.s32.totalorder %s13, 4
      %s23 = sphi 0, %s25
      %s26 = sphi 0, %s23
      %s27 = sphi 0, %s26
      %s43 = sphi 0, %s27
      %s47 = sphi 0, %s47
      %s49 = sphi 0, %s47
      %s50 = sphi 0, %s49
      %s64 = sphi 0, %s50
      %s68 = sphi 0, %s68
      %s70 = sphi 0, %s68
      %s71 = sphi 0, %s70
      %s85 = sphi 0, %s71
      %s89 = sphi 0, %s89
      %s91 = sphi 0, %s89
      %s92 = sphi 0, %s91
      %s106 = sphi 0, %s92
      %s112 = sphi 0, %s114
      %s115 = sphi 0, %s112
      %s116 = sphi 0, %s115
      %s132 = sphi 0, %s116
    $region4: #{tpu_custom_call.1} parent=1 // loop_header_branch
      %16 = sbr.rel (%p14) target = $region8
    $region5: #{tpu_custom_call.1} parent=1 // loop_body
      %s18 = ssub.s32 %s13, 1
      %s19 = ssub.s32 %s13, 2
      %s20 = sadd.s32 %s13, 1
      %s21 = ssub.s32 %s13, %s20
      %p22 = scmp.eq.s32.totalorder %s21, 0
      %s24 = sadd.s32 %s23, 1
      %s25 = scalar_select %p22, %s23, %s24
      %p28 = pneg %p22
      %p29 = scmp.eq.s32.totalorder %s13, 1
      %p30 = por %p28, %p29
      %p31 = scmp.ne.s32.totalorder %s23, %s26
      %p32 = scmp.eq.s32.totalorder %s13, 0
      %p33 = por %p31, %p32
      %p34 = scmp.ne.s32.totalorder %s23, %s26
      %p35 = scmp.eq.s32.totalorder %s18, 1
      %p36 = por %p34, %p35
      %p37 = scmp.ne.s32.totalorder %s26, %s27
      %p38 = scmp.eq.s32.totalorder %s18, 0
      %p39 = por %p37, %p38
      %p40 = scmp.ne.s32.totalorder %s26, %s27
      %p41 = scmp.eq.s32.totalorder %s19, 1
      %p42 = por %p40, %p41
      %p44 = scmp.ne.s32.totalorder %s27, %s43
      %p45 = scmp.eq.s32.totalorder %s19, 0
      %p46 = por %p44, %p45
      %s48 = sadd.s32 %s47, 1
      %p51 = scmp.eq.s32.totalorder %s13, 1
      %p52 = scmp.ne.s32.totalorder %s47, %s49
      %p53 = scmp.eq.s32.totalorder %s13, 0
      %p54 = por %p52, %p53
      %p55 = scmp.ne.s32.totalorder %s47, %s49
      %p56 = scmp.eq.s32.totalorder %s18, 1
      %p57 = por %p55, %p56
      %p58 = scmp.ne.s32.totalorder %s49, %s50
      %p59 = scmp.eq.s32.totalorder %s18, 0
      %p60 = por %p58, %p59
      %p61 = scmp.ne.s32.totalorder %s49, %s50
      %p62 = scmp.eq.s32.totalorder %s19, 1
      %p63 = por %p61, %p62
      %p65 = scmp.ne.s32.totalorder %s50, %s64
      %p66 = scmp.eq.s32.totalorder %s19, 0
      %p67 = por %p65, %p66
      %s69 = sadd.s32 %s68, 1
      %p72 = scmp.eq.s32.totalorder %s13, 1
      %p73 = scmp.ne.s32.totalorder %s68, %s70
      %p74 = scmp.eq.s32.totalorder %s13, 0
      %p75 = por %p73, %p74
      %p76 = scmp.ne.s32.totalorder %s68, %s70
      %p77 = scmp.eq.s32.totalorder %s18, 1
      %p78 = por %p76, %p77
      %p79 = scmp.ne.s32.totalorder %s70, %s71
      %p80 = scmp.eq.s32.totalorder %s18, 0
      %p81 = por %p79, %p80
      %p82 = scmp.ne.s32.totalorder %s70, %s71
      %p83 = scmp.eq.s32.totalorder %s19, 1
      %p84 = por %p82, %p83
      %p86 = scmp.ne.s32.totalorder %s71, %s85
      %p87 = scmp.eq.s32.totalorder %s19, 0
      %p88 = por %p86, %p87
      %s90 = sadd.s32 %s89, 1
      %p93 = scmp.eq.s32.totalorder %s13, 1
      %p94 = scmp.ne.s32.totalorder %s89, %s91
      %p95 = scmp.eq.s32.totalorder %s13, 0
      %p96 = por %p94, %p95
      %p97 = scmp.ne.s32.totalorder %s89, %s91
      %p98 = scmp.eq.s32.totalorder %s18, 1
      %p99 = por %p97, %p98
      %p100 = scmp.ne.s32.totalorder %s91, %s92
      %p101 = scmp.eq.s32.totalorder %s18, 0
      %p102 = por %p100, %p101
      %p103 = scmp.ne.s32.totalorder %s91, %s92
      %p104 = scmp.eq.s32.totalorder %s19, 1
      %p105 = por %p103, %p104
      %p107 = scmp.ne.s32.totalorder %s92, %s106
      %p108 = scmp.eq.s32.totalorder %s19, 0
      %p109 = por %p107, %p108
      %s110 = ssub.s32 %s13, %s20
      %p111 = scmp.eq.s32.totalorder %s110, 0
      %s113 = sadd.s32 %s112, 1
      %s114 = scalar_select %p111, %s112, %s113
      %p117 = pneg %p111
      %p118 = scmp.eq.s32.totalorder %s13, 1
      %p119 = por %p117, %p118
      %p120 = scmp.ne.s32.totalorder %s112, %s115
      %p121 = scmp.eq.s32.totalorder %s13, 0
      %p122 = por %p120, %p121
      %p123 = scmp.ne.s32.totalorder %s112, %s115
      %p124 = scmp.eq.s32.totalorder %s18, 1
      %p125 = por %p123, %p124
      %p126 = scmp.ne.s32.totalorder %s115, %s116
      %p127 = scmp.eq.s32.totalorder %s18, 0
      %p128 = por %p126, %p127
      %p129 = scmp.ne.s32.totalorder %s115, %s116
      %p130 = scmp.eq.s32.totalorder %s19, 1
      %p131 = por %p129, %p130
      %p133 = scmp.ne.s32.totalorder %s116, %s132
      %p134 = scmp.eq.s32.totalorder %s19, 0
      %p135 = por %p133, %p134
      %p136 = scmp.le.s32.totalorder 1, %s13
      %p137 = scmp.lt.s32.totalorder %s13, 3
      %p138 = pnand %p136, %p137
      %p139 = pneg %p138
      // Predicated region
      $region9: #{tpu_custom_call.1} parent=5 // pred_check
        _
      $region10: #{tpu_custom_call.1} parent=5 // pred_check_branch
        %141 = sbr.rel (%p138) target = $region12
      $region11: #{tpu_custom_call.1} parent=5 // pred_region
        %s142 = ssub.s32 %s13, 1
        // Predicated region
        $region13: #{tpu_custom_call.1} parent=11 // pred_check
          %p143 = pneg %p60
        $region14: #{tpu_custom_call.1} parent=11 // pred_check_branch
          %145 = sbr.rel (%p143) target = $region16
        $region15: #{tpu_custom_call.1} parent=11 // pred_region
          _
        $region16: #{tpu_custom_call.1} parent=11 // pred_fallthru
          _
        // Predicated region
        $region17: #{tpu_custom_call.1} parent=11 // pred_check
          %p146 = pneg %p81
        $region18: #{tpu_custom_call.1} parent=11 // pred_check_branch
          %148 = sbr.rel (%p146) target = $region20
        $region19: #{tpu_custom_call.1} parent=11 // pred_region
          _
        $region20: #{tpu_custom_call.1} parent=11 // pred_fallthru
          _
        // Predicated region
        $region21: #{tpu_custom_call.1} parent=11 // pred_check
          %p149 = pneg %p102
        $region22: #{tpu_custom_call.1} parent=11 // pred_check_branch
          %151 = sbr.rel (%p149) target = $region24
        $region23: #{tpu_custom_call.1} parent=11 // pred_region
          _
        $region24: #{tpu_custom_call.1} parent=11 // pred_fallthru
          _
      $region12: #{tpu_custom_call.1} parent=5 // pred_fallthru
        _
      %p152 = scmp.lt.s32.totalorder %s13, 2
      // Predicated region
      $region25: #{tpu_custom_call.1} parent=5 // pred_check
        %p153 = pneg %p152
      $region26: #{tpu_custom_call.1} parent=5 // pred_check_branch
        %155 = sbr.rel (%p153) target = $region28
      $region27: #{tpu_custom_call.1} parent=5 // pred_region
        // Predicated region
        $region29: #{tpu_custom_call.1} parent=27 // pred_check
          %p156 = pneg %p33
        $region30: #{tpu_custom_call.1} parent=27 // pred_check_branch
          %158 = sbr.rel (%p156) target = $region32
        $region31: #{tpu_custom_call.1} parent=27 // pred_region
          %p159 = scmp.lt.s32.totalorder %s13, 1
          %s160 = scalar_select %p159, %s13, 1
          %s161 = smul.addr %s160, 2
          %s162 = smul.addr %s161, 4
          %s163 = scalar_lea.vmem %s0, %s162
        $region32: #{tpu_custom_call.1} parent=27 // pred_fallthru
          _
      $region28: #{tpu_custom_call.1} parent=5 // pred_fallthru
        _
      %p164 = scmp.le.s32.totalorder 1, %s13
      %p165 = scmp.lt.s32.totalorder %s13, 3
      %p166 = pnand %p164, %p165
      %p167 = pneg %p166
      // Predicated region
      $region33: #{tpu_custom_call.1} parent=5 // pred_check
        _
      $region34: #{tpu_custom_call.1} parent=5 // pred_check_branch
        %169 = sbr.rel (%p166) target = $region36
      $region35: #{tpu_custom_call.1} parent=5 // pred_region
        %s170 = ssub.s32 %s13, 1
        %p171 = scmp.lt.s32.totalorder %s18, 1
        %s172 = scalar_select %p171, %s18, 1
        %s173 = smul.addr %s172, 2
        %s174 = smul.addr %s173, 4
        %s175 = scalar_lea.vmem %s0, %s174
        %p176 = pneg %p39
        %p177 = pneg %p36
        %p178 = pneg %p60
        %p179 = pneg %p57
        %p180 = pneg %p81
        %p181 = pneg %p78
        %p182 = pneg %p102
        %p183 = pneg %p99
        %p184 = pneg %p128
        %p185 = pneg %p125
        %s186 = sand.u32 %s115, 1
        %s187 = scalar_lea.sflag [#allocation3], %s186
        %s188 = sand.u32 %s115, 1
        %s189 = smul.addr %s188, 4
        %s190 = scalar_lea.vmem [#allocation2], %s189
        %p191 = scmp.lt.s32.totalorder %s18, 1
        %s192 = scalar_select %p191, %s18, 1
        %s193 = smul.addr %s192, 2
        %s194 = smul.addr %s193, 4
        %s195 = scalar_lea.vmem %s0, %s194
        %v197 = vld [vmem:[%s1] sm:$0xf]
        %v198 = vld [vmem:[%s1 + $0x4] sm:$0xf]
        %v199 = vld [vmem:[%s1 + $0x8] sm:$0xf]
        %v200 = vld [vmem:[%s1 + $0xc] sm:$0xf]
        %v201 = vld [vmem:[%s1 + $0x10] sm:$0xf]
        %v202 = vld [vmem:[%s1 + $0x14] sm:$0xf]
        %v203 = vld [vmem:[%s1 + $0x18] sm:$0xf]
        %v204 = vld [vmem:[%s1 + $0x1c] sm:$0xf]
        %v205 = vld [vmem:[%s1 + $0x20] sm:$0xf]
        %v206 = vld [vmem:[%s1 + $0x24] sm:$0xf]
        %v207 = vld [vmem:[%s1 + $0x28] sm:$0xf]
        %v208 = vld [vmem:[%s1 + $0x2c] sm:$0xf]
        %v209 = vld [vmem:[%s1 + $0x30] sm:$0xf]
        %v210 = vld [vmem:[%s1 + $0x34] sm:$0xf]
        %v211 = vld [vmem:[%s1 + $0x38] sm:$0xf]
        %v212 = vld [vmem:[%s1 + $0x3c] sm:$0xf]
        %v213 = vld [vmem:[%s1 + $0x40] sm:$0xf]
        %v214 = vld [vmem:[%s1 + $0x44] sm:$0xf]
        %v215 = vld [vmem:[%s1 + $0x48] sm:$0xf]
        %v216 = vld [vmem:[%s1 + $0x4c] sm:$0xf]
        %v217 = vld [vmem:[%s1 + $0x50] sm:$0xf]
        %v218 = vld [vmem:[%s1 + $0x54] sm:$0xf]
        %v219 = vld [vmem:[%s1 + $0x58] sm:$0xf]
        %v220 = vld [vmem:[%s1 + $0x5c] sm:$0xf]
        %v221 = vld [vmem:[%s1 + $0x60] sm:$0xf]
        %v222 = vld [vmem:[%s1 + $0x64] sm:$0xf]
        %v223 = vld [vmem:[%s1 + $0x68] sm:$0xf]
        %v224 = vld [vmem:[%s1 + $0x6c] sm:$0xf]
        %v225 = vld [vmem:[%s1 + $0x70] sm:$0xf]
        %v226 = vld [vmem:[%s1 + $0x74] sm:$0xf]
        %v227 = vld [vmem:[%s1 + $0x78] sm:$0xf]
        %v228 = vld [vmem:[%s1 + $0x7c] sm:$0xf]
        %v229 = vld [vmem:[%s2] sm:$0x3]
        %v230 = vld [vmem:[%s3] sm:$0xf]
        %v231 = vlaneseq
        %v232 = vand.u32 %v231, 127
        %vm233 = vcmp.ge.s32.totalorder %v232, 0
        %vm234 = vcmp.lt.s32.totalorder %v232, 1
        %vm235 = vmand %vm233, %vm234
        %v236 = vsel %vm235, 1, 0
        %v237 = vcvt.s32.f32 %v236
        %vm238 = vcmp.ge.s32.totalorder %v232, 1
        %vm239 = vcmp.lt.s32.totalorder %v232, 5
        %vm240 = vmand %vm238, %vm239
        %v241 = vsel %vm240, 1, 0
        %v242 = vcvt.s32.f32 %v241
        %vm243 = vcmp.ge.s32.totalorder %v232, 5
        %vm244 = vcmp.lt.s32.totalorder %v232, 14
        %vm245 = vmand %vm243, %vm244
        %v246 = vsel %vm245, 1, 0
        %v247 = vcvt.s32.f32 %v246
        %vm248 = vcmp.ge.s32.totalorder %v232, 14
        %vm249 = vcmp.lt.s32.totalorder %v232, 50
        %vm250 = vmand %vm248, %vm249
        %v251 = vsel %vm250, 1, 0
        %v252 = vcvt.s32.f32 %v251
        %v253 = vld [vmem:[%s195] sm:$0xff]
        %v255 = vcombine.high %v253, %v253
        %v257 = vpack.c.bf16 %v253, %v253
        %v258 = vpack.c.bf16 %v255, %v255
        %v291 = vunpack.c.l.b16 %v197
        %v292 = vunpack.c.l.b16 %v198
        %v293 = vunpack.c.l.b16 %v199
        %v294 = vunpack.c.l.b16 %v200
        %v295 = vunpack.c.l.b16 %v201
        %v296 = vunpack.c.l.b16 %v202
        %v297 = vunpack.c.l.b16 %v203
        %v298 = vunpack.c.l.b16 %v204
        %v299 = vunpack.c.l.b16 %v205
        %v300 = vunpack.c.l.b16 %v206
        %v301 = vunpack.c.l.b16 %v207
        %v302 = vunpack.c.l.b16 %v208
        %v303 = vunpack.c.l.b16 %v209
        %v304 = vunpack.c.l.b16 %v210
        %v305 = vunpack.c.l.b16 %v211
        %v306 = vunpack.c.l.b16 %v212
        %v307 = vunpack.c.l.b16 %v213
        %v308 = vunpack.c.l.b16 %v214
        %v309 = vunpack.c.l.b16 %v215
        %v310 = vunpack.c.l.b16 %v216
        %v311 = vunpack.c.l.b16 %v217
        %v312 = vunpack.c.l.b16 %v218
        %v313 = vunpack.c.l.b16 %v219
        %v314 = vunpack.c.l.b16 %v220
        %v315 = vunpack.c.l.b16 %v221
        %v316 = vunpack.c.l.b16 %v222
        %v317 = vunpack.c.l.b16 %v223
        %v318 = vunpack.c.l.b16 %v224
        %v319 = vunpack.c.l.b16 %v225
        %v320 = vunpack.c.l.b16 %v226
        %v321 = vunpack.c.l.b16 %v227
        %v322 = vunpack.c.l.b16 %v228
        %v323 = vpack.c.b16 %v292, %v291
        %v324 = vpack.c.b16 %v294, %v293
        %v325 = vpack.c.b16 %v296, %v295
        %v326 = vpack.c.b16 %v298, %v297
        %v327 = vpack.c.b16 %v300, %v299
        %v328 = vpack.c.b16 %v302, %v301
        %v329 = vpack.c.b16 %v304, %v303
        %v330 = vpack.c.b16 %v306, %v305
        %v331 = vpack.c.b16 %v308, %v307
        %v332 = vpack.c.b16 %v310, %v309
        %v333 = vpack.c.b16 %v312, %v311
        %v334 = vpack.c.b16 %v314, %v313
        %v335 = vpack.c.b16 %v316, %v315
        %v336 = vpack.c.b16 %v318, %v317
        %v337 = vpack.c.b16 %v320, %v319
        %v338 = vpack.c.b16 %v322, %v321
        %355 = vmatprep.subr.bf16.mxu0 0
        %356 = vmatpush1.bf16.msra.mxu0 %v330
        %357 = vmatprep.subr.bf16.mxu0 0
        %358 = vmatpush1.bf16.msra.mxu0 %v329
        %359 = vmatprep.subr.bf16.mxu0 0
        %360 = vmatpush1.bf16.msra.mxu0 %v328
        %361 = vmatprep.subr.bf16.mxu0 0
        %362 = vmatpush1.bf16.msra.mxu0 %v327
        %363 = vmatprep.subr.bf16.mxu0 0
        %364 = vmatpush1.bf16.msra.mxu0 %v326
        %365 = vmatprep.subr.bf16.mxu0 0
        %366 = vmatpush1.bf16.msra.mxu0 %v325
        %367 = vmatprep.subr.bf16.mxu0 0
        %368 = vmatpush1.bf16.msra.mxu0 %v324
        %369 = vmatprep.subr.bf16.mxu0 0
        %370 = vmatpush1.bf16.msra.mxu0 %v323
        %371 = vmatprep.subr.bf16.mxu0 0
        %372 = vmatpush2.bf16.msra.mxu0 %v338
        %373 = vmatprep.subr.bf16.mxu0 0
        %374 = vmatpush2.bf16.msra.mxu0 %v337
        %375 = vmatprep.subr.bf16.mxu0 0
        %376 = vmatpush2.bf16.msra.mxu0 %v336
        %377 = vmatprep.subr.bf16.mxu0 0
        %378 = vmatpush2.bf16.msra.mxu0 %v335
        %379 = vmatprep.subr.bf16.mxu0 0
        %380 = vmatpush2.bf16.msra.mxu0 %v334
        %381 = vmatprep.subr.bf16.mxu0 0
        %382 = vmatpush2.bf16.msra.mxu0 %v333
        %383 = vmatprep.subr.bf16.mxu0 0
        %384 = vmatpush2.bf16.msra.mxu0 %v332
        %385 = vmatprep.subr.bf16.mxu0 0
        %386 = vmatpush2.bf16.msra.mxu0 %v331
        %387 = vmatprep.mubr.bf16.mxu0 %v258
        %388 = vmatmul.mubr.bf16.gmra.mxu0 %v257
        %v389 = vpop.f32.mrf.mxu0
        %v390 = vadd.f32 0.0, %v389
        %v391 = vpop.f32.mrf.mxu0
        %v392 = vpop.f32.mrf.mxu0
        %v393 = vpop.f32.mrf.mxu0
        %394 = vdwg.mxu0
        %v395 = vmul.f32 %v390, %v237
        %v396 = vmul.f32 %v390, %v242
        %v397 = vmul.f32 %v390, %v247
        %v398 = vmul.f32 %v390, %v252
        %v400 = vrot.slane %v396, 4
        %v403 = vrot.slane %v398, 4
        %vm405 = vcmask 1043456
        %v406 = vsel %vm405, %v395, %v400
        %v407 = vsel %vm405, %v397, %v403
        %v408 = vpack.c.bf16 %v407, %v406
        %vm409 = vcmask 130048
        %v411 = vsel %vm409, %v229, 0
        %413 = vmatprep.subr.bf16.mxu0 0
        %414 = vmatpush1.bf16.msra.mxu0 0
        %415 = vmatprep.subr.bf16.mxu0 0
        %416 = vmatpush1.bf16.msra.mxu0 0
        %417 = vmatprep.subr.bf16.mxu0 0
        %418 = vmatpush1.bf16.msra.mxu0 0
        %419 = vmatprep.subr.bf16.mxu0 0
        %420 = vmatpush1.bf16.msra.mxu0 0
        %421 = vmatprep.subr.bf16.mxu0 0
        %422 = vmatpush1.bf16.msra.mxu0 0
        %423 = vmatprep.subr.bf16.mxu0 0
        %424 = vmatpush1.bf16.msra.mxu0 0
        %425 = vmatprep.subr.bf16.mxu0 0
        %426 = vmatpush1.bf16.msra.mxu0 0
        %427 = vmatprep.subr.bf16.mxu0 0
        %428 = vmatpush1.bf16.msra.mxu0 %v408
        %429 = vmatprep.subr.bf16.mxu0 0
        %430 = vmatpush2.bf16.msra.mxu0 0
        %431 = vmatprep.subr.bf16.mxu0 0
        %432 = vmatpush2.bf16.msra.mxu0 0
        %433 = vmatprep.subr.bf16.mxu0 0
        %434 = vmatpush2.bf16.msra.mxu0 0
        %435 = vmatprep.subr.bf16.mxu0 0
        %436 = vmatpush2.bf16.msra.mxu0 0
        %437 = vmatprep.subr.bf16.mxu0 0
        %438 = vmatpush2.bf16.msra.mxu0 0
        %439 = vmatprep.subr.bf16.mxu0 0
        %440 = vmatpush2.bf16.msra.mxu0 0
        %441 = vmatprep.subr.bf16.mxu0 0
        %442 = vmatpush2.bf16.msra.mxu0 0
        %443 = vmatprep.subr.bf16.mxu0 0
        %444 = vmatpush2.bf16.msra.mxu0 0
        %445 = vmatprep.mubr.bf16.mxu0 0
        %446 = vmatmul.mubr.bf16.gmra.mxu0 %v411
        %v447 = vpop.f32.mrf.mxu0
        %v448 = vadd.f32 %v230, %v447
        %v449 = vpop.f32.mrf.mxu0
        %v450 = vpop.f32.mrf.mxu0
        %v451 = vpop.f32.mrf.mxu0
        %452 = vdwg.mxu0
        %v453 = vmax.f32 %v448, 0.0
        %vm454 = vcmask 404480
        %455 = vst.msk [vmem:[%s190] sm:$0xf] %vm454, %v453
        %s456 = sand.u32 %s115, 1
        %s457 = scalar_lea.sflag [#allocation3], %s456
        %s458 = sand.u32 %s115, 1
        %s459 = smul.addr %s458, 4
        %s460 = scalar_lea.vmem [#allocation2], %s459
        // Predicated region
        $region37: #{tpu_custom_call.1} parent=35 // pred_check
          %p461 = pneg %p125
        $region38: #{tpu_custom_call.1} parent=35 // pred_check_branch
          %463 = sbr.rel (%p461) target = $region40
        $region39: #{tpu_custom_call.1} parent=35 // pred_region
          %s465 = ssub.s32 64, 64
          %466 = vsyncadd %s457, %s465
          %s467 = smul.addr %s18, 64
          %s468 = scalar_lea.hbm %s4, %s467
          %s470 = sshll.u32 %s460, 4
          %s471 = int_to_ptr.vmem [resolvable:$true] %s470
          %473 = dma.vmem_to_hbm [thread:$0]  %s471, 64, %s468, %s457
        $region40: #{tpu_custom_call.1} parent=35 // pred_fallthru
          _
      $region36: #{tpu_custom_call.1} parent=5 // pred_fallthru
        _
      %p474 = scmp.le.s32.totalorder 2, %s13
      // Predicated region
      $region41: #{tpu_custom_call.1} parent=5 // pred_check
        %p475 = pneg %p474
      $region42: #{tpu_custom_call.1} parent=5 // pred_check_branch
        %477 = sbr.rel (%p475) target = $region44
      $region43: #{tpu_custom_call.1} parent=5 // pred_region
        %s478 = ssub.s32 %s13, 2
        // Predicated region
        $region45: #{tpu_custom_call.1} parent=43 // pred_check
          %p479 = pneg %p131
        $region46: #{tpu_custom_call.1} parent=43 // pred_check_branch
          %481 = sbr.rel (%p479) target = $region48
        $region47: #{tpu_custom_call.1} parent=43 // pred_region
          %s482 = sand.u32 %s116, 1
          %s483 = scalar_lea.sflag [#allocation3], %s482
          %s484 = sand.u32 %s116, 1
          %s485 = smul.addr %s484, 4
          %s486 = scalar_lea.vmem [#allocation2], %s485
          %487 = dma.done %s483, 64
        $region48: #{tpu_custom_call.1} parent=43 // pred_fallthru
          _
      $region44: #{tpu_custom_call.1} parent=5 // pred_fallthru
        _
    $region6: #{tpu_custom_call.1} parent=1 // loop_footer
      %s17 = sadd.s32 1, %s13
    $region7: #{tpu_custom_call.1} parent=1 // loop_footer_branch
      %12 = sbr.rel target = $region3
    $region8: #{tpu_custom_call.1} parent=1 // loop_exit
      _
    %488 = vsyncpa [#allocation3], 1
    %s489 = scalar_lea.sflag [#allocation3], 1
    %490 = vsyncpa %s489, 1

</llo_original>
